<compile_context>
chip_gen: v6e
topology: v6e:2x2x1
jax: 0.10.0
libtpu: 0.0.40
codegen_flags: <defaults>
</compile_context>

<pallas_src>
import jax
import jax.numpy as jnp
from jax.experimental import pallas as pl
from jax.experimental.pallas import tpu as pltpu


def _round_up(x, m):
    return ((x + m - 1) // m) * m


def _pick_tile(dim, tile_max, align):
    """Pick (tile, padded_dim).

    If the whole dim fits in one tile, use the full (possibly unaligned) extent
    as a single block — legal, and avoids any padding.  Otherwise pad the dim
    to a multiple of `align` and pick the largest aligned tile <= tile_max that
    divides the padded extent.
    """
    if dim <= tile_max:
        return dim, dim
    padded = _round_up(dim, align)
    tile = max(align, (tile_max // align) * align)
    while padded % tile != 0:
        tile -= align
    return tile, padded


def _linear_kernel(z_ref, w_ref, b_ref, o_ref, acc_ref):
    # z block: (tm, tk); w block: (tk, tn) (weight already stored transposed).
    k = pl.program_id(2)

    @pl.when(k == 0)
    def _():
        # Fold the bias into the accumulator init (sublane broadcast of (1, tn)).
        acc_ref[...] = jnp.broadcast_to(b_ref[...], acc_ref.shape)

    acc_ref[...] += jnp.dot(z_ref[...], w_ref[...],
                            preferred_element_type=jnp.float32)

    @pl.when(k == pl.num_programs(2) - 1)
    def _():
        o_ref[...] = acc_ref[...].astype(o_ref.dtype)


def prepare_sphere_decoder_params(weight, bias, *, compute_dtype=jnp.float32):
    """One-time (init-time) transform of the PyTorch nn.Linear parameters.

    weight: (output_dim, latent_dim) -> (latent_dim, output_dim) in compute_dtype
    bias:   (output_dim,)            -> (1, output_dim) in float32
    Doing this once keeps per-call HBM traffic to just z / weight-stream / out.
    """
    w_kn = jnp.asarray(weight).T.astype(compute_dtype)
    b_row = jnp.asarray(bias).astype(jnp.float32).reshape(1, -1)
    return w_kn, b_row


def sphere_decoder_linear(z, w_kn, b_row, *, tm=512, tn=512, tk=None):
    """y = z @ w_kn + b_row  (== z @ weight.T + bias of the original module).

    z:     (B, K)
    w_kn:  (K, N)  pre-transposed / pre-cast weight from prepare_sphere_decoder_params
    b_row: (1, N)  float32 bias row
    """
    B, K = z.shape
    K2, N = w_kn.shape
    assert K == K2, (K, K2)
    assert b_row.shape == (1, N), b_row.shape

    out_dtype = z.dtype
    compute_dtype = w_kn.dtype
    itemsize = jnp.dtype(compute_dtype).itemsize
    if tk is None:
        tk = 2048 if itemsize <= 2 else 1024   # fewer k steps; VMEM allows it

    zc = z.astype(compute_dtype)               # no-op when dtypes already match

    tm, Bp = _pick_tile(B, tm, 8)
    tk, Kp = _pick_tile(K, tk, 128)
    tn, Np = _pick_tile(N, tn, 128)
    grid_m, grid_n, grid_k = Bp // tm, Np // tn, Kp // tk

    # v7x megacore: guarantee >= 2 blocks along a "parallel" axis when B fits a
    # single row block (no-op / harmless on v5e & v6e).
    if grid_m == 1 and grid_n == 1 and Np % 256 == 0:
        tn = Np // 2
        grid_n = 2

    # Conditional padding — skipped entirely when already tile-aligned.
    if (Bp, Kp) != (B, K):
        zc = jnp.pad(zc, ((0, Bp - B), (0, Kp - K)))
    if (Kp, Np) != (K, N):
        w_kn = jnp.pad(w_kn, ((0, Kp - K), (0, Np - N)))
    if Np != N:
        b_row = jnp.pad(b_row, ((0, 0), (0, Np - N)))

    out_itemsize = jnp.dtype(out_dtype).itemsize
    bytes_accessed = (Bp * Kp * itemsize + Kp * Np * itemsize
                      + Np * 4 + Bp * Np * out_itemsize)
    # Double-buffered inputs + double-buffered output tile + f32 accumulator.
    vmem_est = (2 * (tm * tk + tk * tn) * itemsize + 2 * tn * 4
                + 2 * tm * tn * out_itemsize + tm * tn * 4)
    vmem_limit = int(min(max(2 * vmem_est, 32 << 20), 48 << 20))

    out = pl.pallas_call(
        _linear_kernel,
        out_shape=jax.ShapeDtypeStruct((Bp, Np), out_dtype),
        grid=(grid_m, grid_n, grid_k),
        in_specs=[
            pl.BlockSpec((tm, tk), lambda i, j, k: (i, k)),   # z
            pl.BlockSpec((tk, tn), lambda i, j, k: (k, j)),   # W^T  (K, N)
            pl.BlockSpec((1, tn), lambda i, j, k: (0, j)),    # bias row
        ],
        out_specs=pl.BlockSpec((tm, tn), lambda i, j, k: (i, j)),
        scratch_shapes=[pltpu.VMEM((tm, tn), jnp.float32)],
        compiler_params=pltpu.CompilerParams(
            dimension_semantics=("parallel", "parallel", "arbitrary"),
            vmem_limit_bytes=vmem_limit),
        cost_estimate=pl.CostEstimate(
            flops=2 * Bp * Np * Kp, transcendentals=0,
            bytes_accessed=bytes_accessed),
    )(zc, w_kn, b_row)

    if (Bp, Np) != (B, N):
        out = out[:B, :N]
    return out


def sphere_decoder_linear_torch_layout(z, weight, bias, *, compute_dtype=None,
                                       **tile_kwargs):
    """Convenience wrapper with the PyTorch module's (N, K) weight layout.
    Prefer calling prepare_sphere_decoder_params once and reusing its outputs."""
    if compute_dtype is None:
        compute_dtype = z.dtype
    w_kn, b_row = prepare_sphere_decoder_params(weight, bias,
                                                compute_dtype=compute_dtype)
    return sphere_decoder_linear(z, w_kn, b_row, **tile_kwargs)


if __name__ == "__main__":
    # Small shapes consistent with the module.
    # TODO(synk): at these sizes the call is launch-overhead dominated; in a
    # real decoder this linear should be fused into the upstream kernel.
    latent_dim, output_dim, batch = 32, 64, 8

    key = jax.random.PRNGKey(0)
    kz, kw, kb = jax.random.split(key, 3)

    # nn.Linear default init: U(-1/sqrt(in), 1/sqrt(in)).
    bound = latent_dim ** -0.5
    weight = jax.random.uniform(kw, (output_dim, latent_dim), jnp.float32,
                                -bound, bound)
    bias = jax.random.uniform(kb, (output_dim,), jnp.float32, -bound, bound)
    z = jax.random.normal(kz, (batch, latent_dim), jnp.float32)

    ref = z @ weight.T + bias

    # One-time parameter prep (model-init time), then the jitted hot path.
    w_kn, b_row = prepare_sphere_decoder_params(weight, bias)
    fwd = jax.jit(sphere_decoder_linear)
    out = jax.block_until_ready(fwd(z, w_kn, b_row))
    assert out.shape == (batch, output_dim)
    assert jnp.allclose(out, ref, atol=1e-5, rtol=1e-5)

    # bf16-weight path (halves weight HBM bytes on bandwidth-bound v5e/v6e);
    # f32 accumulation + f32 bias, output stays in z.dtype.
    w_kn16, b_row16 = prepare_sphere_decoder_params(
        weight, bias, compute_dtype=jnp.bfloat16)
    out_bf16 = jax.block_until_ready(jax.jit(sphere_decoder_linear)(z, w_kn16, b_row16))
    assert out_bf16.shape == (batch, output_dim)
    assert out_bf16.dtype == z.dtype
    assert jnp.allclose(out_bf16, ref, atol=1e-1, rtol=1e-1)

    print("KERNEL_OK")
</pallas_src>

<mosaic_0001>
module attributes {stable_mosaic.version = 11 : i64} {
  func.func @_linear_kernel(%arg0: i32, %arg1: i32, %arg2: i32, %arg3: memref<8x32xf32, #tpu.memory_space<vmem>>, %arg4: memref<32x64xf32, #tpu.memory_space<vmem>>, %arg5: memref<1x64xf32, #tpu.memory_space<vmem>>, %arg6: memref<8x64xf32, #tpu.memory_space<vmem>>, %arg7: memref<8x64xf32, #tpu.memory_space<vmem>>) attributes {dimension_semantics = [#tpu.dimension_semantics<parallel>, #tpu.dimension_semantics<parallel>, #tpu.dimension_semantics<arbitrary>], iteration_bounds = array<i64: 1, 1, 1>, scalar_prefetch = 0 : i64, scratch_operands = 1 : i64, tpu.core_type = #tpu.core_type<tc>, window_params = [{transform_indices = @transform_0, window_bounds = array<i64: 8, 32>}, {transform_indices = @transform_1, window_bounds = array<i64: 32, 64>}, {transform_indices = @transform_2, window_bounds = array<i64: 1, 64>}, {transform_indices = @transform_3, window_bounds = array<i64: 8, 64>}]} {
    %c0_i32 = arith.constant 0 : i32
    %0 = arith.cmpi eq, %arg2, %c0_i32 : i32
    %1 = arith.extui %0 : i1 to i32
    %c0_i32_0 = arith.constant 0 : i32
    %2 = arith.cmpi ne, %1, %c0_i32_0 : i32
    scf.if %2 {
      %c0_10 = arith.constant 0 : index
      %c0_11 = arith.constant 0 : index
      %12 = vector.load %arg5[%c0_10, %c0_11] : memref<1x64xf32, #tpu.memory_space<vmem>>, vector<1x64xf32>
      %13 = vector.shape_cast %12 : vector<1x64xf32> to vector<1x64xf32>
      %14 = vector.broadcast %13 : vector<1x64xf32> to vector<8x64xf32>
      %c0_12 = arith.constant 0 : index
      %c0_13 = arith.constant 0 : index
      %15 = vector.load %arg7[%c0_12, %c0_13] : memref<8x64xf32, #tpu.memory_space<vmem>>, vector<8x64xf32>
      tpu.vector_store %arg7[%c0_12, %c0_13], %14 {strides = array<i32>} : memref<8x64xf32, #tpu.memory_space<vmem>>, vector<8x64xf32>,
    } else {
    }
    %c0 = arith.constant 0 : index
    %c0_1 = arith.constant 0 : index
    %3 = vector.load %arg7[%c0, %c0_1] : memref<8x64xf32, #tpu.memory_space<vmem>>, vector<8x64xf32>
    %c0_2 = arith.constant 0 : index
    %c0_3 = arith.constant 0 : index
    %4 = vector.load %arg3[%c0_2, %c0_3] : memref<8x32xf32, #tpu.memory_space<vmem>>, vector<8x32xf32>
    %c0_4 = arith.constant 0 : index
    %c0_5 = arith.constant 0 : index
    %5 = vector.load %arg4[%c0_4, %c0_5] : memref<32x64xf32, #tpu.memory_space<vmem>>, vector<32x64xf32>
    %cst = arith.constant dense<0.000000e+00> : vector<8x64xf32>
    %6 = tpu.matmul %4, %5, %cst {dimension_numbers = #tpu.dot_dimension_numbers<[1], [0], [0], [1], [0, 0, 1, 1], [], []>} : vector<8x32xf32>, vector<32x64xf32>, vector<8x64xf32> -> vector<8x64xf32>
    %7 = arith.addf %3, %6 : vector<8x64xf32>
    %c0_6 = arith.constant 0 : index
    %c0_7 = arith.constant 0 : index
    %8 = vector.load %arg7[%c0_6, %c0_7] : memref<8x64xf32, #tpu.memory_space<vmem>>, vector<8x64xf32>
    tpu.vector_store %arg7[%c0_6, %c0_7], %7 {strides = array<i32>} : memref<8x64xf32, #tpu.memory_space<vmem>>, vector<8x64xf32>,
    %c0_i32_8 = arith.constant 0 : i32
    %9 = arith.cmpi eq, %arg2, %c0_i32_8 : i32
    %10 = arith.extui %9 : i1 to i32
    %c0_i32_9 = arith.constant 0 : i32
    %11 = arith.cmpi ne, %10, %c0_i32_9 : i32
    scf.if %11 {
      %c0_10 = arith.constant 0 : index
      %c0_11 = arith.constant 0 : index
      %12 = vector.load %arg7[%c0_10, %c0_11] : memref<8x64xf32, #tpu.memory_space<vmem>>, vector<8x64xf32>
      %c0_12 = arith.constant 0 : index
      %c0_13 = arith.constant 0 : index
      %13 = vector.load %arg6[%c0_12, %c0_13] : memref<8x64xf32, #tpu.memory_space<vmem>>, vector<8x64xf32>
      tpu.vector_store %arg6[%c0_12, %c0_13], %12 {strides = array<i32>} : memref<8x64xf32, #tpu.memory_space<vmem>>, vector<8x64xf32>,
    } else {
    }
    return
  }
  func.func @transform_0(%arg0: i32, %arg1: i32, %arg2: i32) -> (i32, i32) {
    %c0_i32 = arith.constant 0 : i32
    return %arg0, %arg2 : i32, i32
  }
  func.func @transform_1(%arg0: i32, %arg1: i32, %arg2: i32) -> (i32, i32) {
    %c0_i32 = arith.constant 0 : i32
    return %arg2, %arg1 : i32, i32
  }
  func.func @transform_2(%arg0: i32, %arg1: i32, %arg2: i32) -> (i32, i32) {
    %c0_i32 = arith.constant 0 : i32
    %c0_i32_0 = arith.constant 0 : i32
    return %c0_i32, %arg1 : i32, i32
  }
  func.func @transform_3(%arg0: i32, %arg1: i32, %arg2: i32) -> (i32, i32) {
    %c0_i32 = arith.constant 0 : i32
    return %arg0, %arg1 : i32, i32
  }
}

</mosaic_0001>

<llo_original>
// kernel: sphere_decoder_linear.1
$region0: #{sphere_decoder_linear.1}
  #allocation0 [shape = 'u32[]', space=smem, size = 0x4, offset = 0x4, fixed_abs, tag = 'smem constant byte address 0x4 - core index']
  #allocation1 [shape = 'u32[144,128]{1,0:T(1,128)}', space=vmem, size = 0x12000, scoped, tag = 'internal scratch']
  #allocation2 [shape = 'f32[8,64]{1,0:T(8,128)}', space=vmem, size = 0x1000, scoped, tag = 'scratch operand']
  %s0 = inlined_call_operand.hbm [shape: f32[8,32], index: 0, kind: input, shape index: {}]
  %s1 = inlined_call_operand.hbm [shape: f32[32,64], index: 1, kind: input, shape index: {}]
  %s2 = inlined_call_operand.vmem [shape: f32[1,64], index: 2, kind: input, shape index: {}]
  %s3 = inlined_call_operand.hbm [shape: f32[8,64], index: 3, kind: output, shape index: {}]
  %s4 = sld [smem:[#allocation0]]
  $region38: #{sphere_decoder_linear.1} parent=0
    _
  %s6 = ssub.s32 1, %s4
  %s7 = scalar_select 0, %s6, %s4
  $region1: #{sphere_decoder_linear.1} parent=0
    #allocation3 [shape = 'u8[4096]{0}', space=vmem, size = 0x1000, scoped, tag = 'input window, operand 0, single buffered']
    #allocation4 [shape = 's32[1]{0}', space=sflag, size = 0x4, scoped, tag = 'scoped memory for sphere_decoder_linear.1']
    #allocation5 [shape = 's32[1]{0}', space=sflag, size = 0x4, scoped, tag = 'scoped memory for sphere_decoder_linear.1']
    #allocation6 [shape = 'u8[16384]{0}', space=vmem, size = 0x4000, scoped, tag = 'input window, operand 1, single buffered']
    #allocation7 [shape = 's32[1]{0}', space=sflag, size = 0x4, scoped, tag = 'scoped memory for sphere_decoder_linear.1']
    #allocation8 [shape = 'u8[4096]{0}', space=vmem, size = 0x1000, scoped, tag = 'output window, operand 0, single buffered']
    %8 = vsyncpa [#allocation4], 0
    %9 = vsyncpa [#allocation7], 0
    %10 = vsyncpa [#allocation5], 0
    // Predicated region
    $region2: #{sphere_decoder_linear.1} parent=1 // pred_check
      _
    $region3: #{sphere_decoder_linear.1} parent=1 // pred_check_branch
      %12 = sbr.rel (0) target = $region5
    $region4: #{sphere_decoder_linear.1} parent=1 // pred_region
      %s14 = ssub.s32 128, 128
      %15 = vsyncadd [#allocation4], %s14
      %s17 = sshll.u32 [#allocation3], 4
      %s18 = int_to_ptr.vmem [resolvable:$true] %s17
      %20 = dma.hbm_to_vmem [thread:$0]  %s0, 128, %s18, [#allocation4]
    $region5: #{sphere_decoder_linear.1} parent=1 // pred_fallthru
      _
    // Predicated region
    $region6: #{sphere_decoder_linear.1} parent=1 // pred_check
      _
    $region7: #{sphere_decoder_linear.1} parent=1 // pred_check_branch
      %22 = sbr.rel (0) target = $region9
    $region8: #{sphere_decoder_linear.1} parent=1 // pred_region
      %s24 = ssub.s32 512, 512
      %25 = vsyncadd [#allocation7], %s24
      %s26 = sshll.u32 [#allocation6], 4
      %s27 = int_to_ptr.vmem [resolvable:$true] %s26
      %32 = dma.hbm_to_vmem [thread:$0]  %s1, 512, %s27, [#allocation7], 128, 128, 8
    $region9: #{sphere_decoder_linear.1} parent=1 // pred_fallthru
      _
    // Predicated region
    $region10: #{sphere_decoder_linear.1} parent=1 // pred_check
      _
    $region11: #{sphere_decoder_linear.1} parent=1 // pred_check_branch
      %34 = sbr.rel (0) target = $region13
    $region12: #{sphere_decoder_linear.1} parent=1 // pred_region
      _
    $region13: #{sphere_decoder_linear.1} parent=1 // pred_fallthru
      _
    // Predicated region
    $region14: #{sphere_decoder_linear.1} parent=1 // pred_check
      _
    $region15: #{sphere_decoder_linear.1} parent=1 // pred_check_branch
      %36 = sbr.rel (0) target = $region17
    $region16: #{sphere_decoder_linear.1} parent=1 // pred_region
      %37 = dma.done [#allocation4], 128
    $region17: #{sphere_decoder_linear.1} parent=1 // pred_fallthru
      _
    // Predicated region
    $region18: #{sphere_decoder_linear.1} parent=1 // pred_check
      _
    $region19: #{sphere_decoder_linear.1} parent=1 // pred_check_branch
      %39 = sbr.rel (0) target = $region21
    $region20: #{sphere_decoder_linear.1} parent=1 // pred_region
      %40 = dma.done [#allocation7], 512
    $region21: #{sphere_decoder_linear.1} parent=1 // pred_fallthru
      _
    %p41 = scmp.eq.s32.totalorder 0, 0
    // Predicated region
    $region22: #{sphere_decoder_linear.1} parent=1 // pred_check
      %p42 = pneg %p41
    $region23: #{sphere_decoder_linear.1} parent=1 // pred_check_branch
      %44 = sbr.rel (%p42) target = $region25
    $region24: #{sphere_decoder_linear.1} parent=1 // pred_region
      %v45 = vld [vmem:[%s2] sm:$0x1]
      %v47 = vlaneseq
      %v48 = vshrl.u32 %v47, 7
      %v49 = vsub.s32 0, %v48
      %v50 = vrot.slane %v45, %v49
      %vm52 = vcmask 523264
      %53 = vst.msk [vmem:[#allocation2] sm:$0xff] %vm52, %v50
    $region25: #{sphere_decoder_linear.1} parent=1 // pred_fallthru
      _
    %v54 = vld [vmem:[#allocation2] sm:$0xff]
    %v55 = vld [vmem:[#allocation3] sm:$0xff]
    %v56 = vld [vmem:[#allocation6] sm:$0xff]
    %v57 = vld [vmem:[#allocation6 + $0x8] sm:$0xff]
    %v58 = vld [vmem:[#allocation6 + $0x10] sm:$0xff]
    %v59 = vld [vmem:[#allocation6 + $0x18] sm:$0xff]
    %vm60 = vcmask 261120
    %v62 = vsel %vm60, %v55, 0
    %64 = vmatprep.subr.mxu0 0.0
    %65 = vmatpush1.msra.mxu0 0.0
    %66 = vmatprep.subr.mxu0 0.0
    %67 = vmatpush1.msra.mxu0 0.0
    %68 = vmatprep.subr.mxu0 0.0
    %69 = vmatpush1.msra.mxu0 0.0
    %70 = vmatprep.subr.mxu0 0.0
    %71 = vmatpush1.msra.mxu0 0.0
    %72 = vmatprep.subr.mxu0 0.0
    %73 = vmatpush1.msra.mxu0 0.0
    %74 = vmatprep.subr.mxu0 0.0
    %75 = vmatpush1.msra.mxu0 0.0
    %76 = vmatprep.subr.mxu0 0.0
    %77 = vmatpush1.msra.mxu0 0.0
    %78 = vmatprep.subr.mxu0 0.0
    %79 = vmatpush1.msra.mxu0 0.0
    %80 = vmatprep.subr.mxu0 0.0
    %81 = vmatpush1.msra.mxu0 0.0
    %82 = vmatprep.subr.mxu0 0.0
    %83 = vmatpush1.msra.mxu0 0.0
    %84 = vmatprep.subr.mxu0 0.0
    %85 = vmatpush1.msra.mxu0 0.0
    %86 = vmatprep.subr.mxu0 0.0
    %87 = vmatpush1.msra.mxu0 0.0
    %88 = vmatprep.subr.mxu0 0.0
    %89 = vmatpush1.msra.mxu0 %v59
    %90 = vmatprep.subr.mxu0 0.0
    %91 = vmatpush1.msra.mxu0 %v58
    %92 = vmatprep.subr.mxu0 0.0
    %93 = vmatpush1.msra.mxu0 %v57
    %94 = vmatprep.subr.mxu0 0.0
    %95 = vmatpush1.msra.mxu0 %v56
    %96 = vmatprep.subr.mxu0 0.0
    %97 = vmatpush2.msra.mxu0 0.0
    %98 = vmatprep.subr.mxu0 0.0
    %99 = vmatpush2.msra.mxu0 0.0
    %100 = vmatprep.subr.mxu0 0.0
    %101 = vmatpush2.msra.mxu0 0.0
    %102 = vmatprep.subr.mxu0 0.0
    %103 = vmatpush2.msra.mxu0 0.0
    %104 = vmatprep.subr.mxu0 0.0
    %105 = vmatpush2.msra.mxu0 0.0
    %106 = vmatprep.subr.mxu0 0.0
    %107 = vmatpush2.msra.mxu0 0.0
    %108 = vmatprep.subr.mxu0 0.0
    %109 = vmatpush2.msra.mxu0 0.0
    %110 = vmatprep.subr.mxu0 0.0
    %111 = vmatpush2.msra.mxu0 0.0
    %112 = vmatprep.subr.mxu0 0.0
    %113 = vmatpush2.msra.mxu0 0.0
    %114 = vmatprep.subr.mxu0 0.0
    %115 = vmatpush2.msra.mxu0 0.0
    %116 = vmatprep.subr.mxu0 0.0
    %117 = vmatpush2.msra.mxu0 0.0
    %118 = vmatprep.subr.mxu0 0.0
    %119 = vmatpush2.msra.mxu0 0.0
    %120 = vmatprep.subr.mxu0 0.0
    %121 = vmatpush2.msra.mxu0 0.0
    %122 = vmatprep.subr.mxu0 0.0
    %123 = vmatpush2.msra.mxu0 0.0
    %124 = vmatprep.subr.mxu0 0.0
    %125 = vmatpush2.msra.mxu0 0.0
    %126 = vmatprep.subr.mxu0 0.0
    %127 = vmatpush2.msra.mxu0 0.0
    %128 = vmatprep.mubr.f32.mxu0 0.0
    %129 = vmatmul.mubr.f32.gmra.mxu0 %v62
    %v130 = vpop.f32.mrf.mxu0
    %v131 = vadd.f32 0.0, %v130
    %v132 = vpop.f32.mrf.mxu0
    %133 = vdwg.mxu0
    %v134 = vadd.f32 %v54, %v131
    %vm135 = vcmask 523264
    %136 = vst.msk [vmem:[#allocation2] sm:$0xff] %vm135, %v134
    // Predicated region
    $region26: #{sphere_decoder_linear.1} parent=1 // pred_check
      %p137 = pneg %p41
    $region27: #{sphere_decoder_linear.1} parent=1 // pred_check_branch
      %139 = sbr.rel (%p137) target = $region29
    $region28: #{sphere_decoder_linear.1} parent=1 // pred_region
      %v140 = vld [vmem:[#allocation2] sm:$0xff]
      %141 = vst.msk [vmem:[#allocation8] sm:$0xff] %vm135, %v140
    $region29: #{sphere_decoder_linear.1} parent=1 // pred_fallthru
      _
    // Predicated region
    $region30: #{sphere_decoder_linear.1} parent=1 // pred_check
      _
    $region31: #{sphere_decoder_linear.1} parent=1 // pred_check_branch
      %143 = sbr.rel (0) target = $region33
    $region32: #{sphere_decoder_linear.1} parent=1 // pred_region
      %s145 = ssub.s32 128, 128
      %146 = vsyncadd [#allocation5], %s145
      %s148 = sshll.u32 [#allocation8], 4
      %s149 = int_to_ptr.vmem [resolvable:$true] %s148
      %151 = dma.vmem_to_hbm [thread:$0]  %s149, 128, %s3, [#allocation5]
    $region33: #{sphere_decoder_linear.1} parent=1 // pred_fallthru
      _
    // Predicated region
    $region34: #{sphere_decoder_linear.1} parent=1 // pred_check
      _
    $region35: #{sphere_decoder_linear.1} parent=1 // pred_check_branch
      %153 = sbr.rel (0) target = $region37
    $region36: #{sphere_decoder_linear.1} parent=1 // pred_region
      %154 = dma.done [#allocation5], 128
    $region37: #{sphere_decoder_linear.1} parent=1 // pred_fallthru
      _
    %155 = vsyncpa [#allocation4], 1
    %156 = vsyncpa [#allocation7], 1
    %157 = vsyncpa [#allocation5], 1

</llo_original>
